<compile_context>
chip_gen: v7x
topology: tpu7x:2x2x1
jax: 0.10.0
libtpu: 0.0.40
codegen_flags: <defaults>
</compile_context>

<pallas_src>
import numpy as np
import jax
import jax.numpy as jnp
from jax.experimental import pallas as pl
from jax.experimental.pallas import tpu as pltpu

# ---- MobileOneBlock config -------------------------------------------------
IN_C = 4
OUT_C = 4
K = 3
STRIDE = 1            # TODO(synk): stride > 1 not implemented in-kernel (flat-lane taps assume stride 1)
PAD = 1
GROUPS = 1            # TODO(synk): grouped / depthwise (groups > 1) variant not implemented in-kernel
NUM_CONV_BRANCHES = 2
USE_SE = False        # TODO(synk): SqueezeExcitation branch not implemented (this config uses nn.Identity)
USE_ACT = True        # activation_layer = nn.ReLU
USE_SCALE_BRANCH = True
EPS = 1e-5            # nn.BatchNorm2d default eps
# NOTE: BatchNorm is evaluated with running statistics (model.eval() semantics).


def _num_tensorcores() -> int:
    """Best-effort TensorCores-per-device count (v7x/v4 megacore: 2, v5e/v6e: 1).

    Used only to pick the batch tiling: single grid step on 1-TC chips, per-image
    parallel grid on 2-TC chips. Falls back to 1 (batch-collapse) if unknown.
    """
    try:
        kind = jax.devices()[0].device_kind.lower()
        if ("v7" in kind) or ("7x" in kind) or ("v4" in kind):
            return 2
    except Exception:
        pass
    try:
        info = pltpu.get_tpu_info()
        for name in ("num_cores", "core_count", "num_tensorcores", "num_tensor_cores"):
            v = getattr(info, name, None)
            if isinstance(v, int) and 0 < v <= 8:
                return v
    except Exception:
        pass
    return 1


# ---- Pallas kernel: fused KxK conv (single im2col dot) + bias + ReLU ---------
def _make_conv_kernel(h, w, cin, cout, k, pad, use_act, ni, lpad):
    hw = h * w

    def kernel(x_ref, w_ref, b_ref, m_ref, o_ref, xp_ref):
        # x_ref : (ni, Cin, H*W)             flattened NCHW input block (ni images)
        # w_ref : (Cout, K*K*Cin)            folded weights, one lane-dense resident tile
        # b_ref : (Cout, 1)                  folded bias (resident)
        # m_ref : (K, 1, H*W)                precomputed 0/1 column-halo masks (resident)
        # o_ref : (ni, Cout, H*W)            lane-dense output (channel-major, NCHW-native)
        # xp_ref: (ni, Cin, lpad+H*W+lpad)   VMEM scratch: flat zero-padded input

        # 1) In-kernel zero padding. Only the two lane-aligned halo strips are zeroed;
        #    the interior is fully overwritten by the lane-aligned interior store.
        zero_halo = jnp.zeros((cin, lpad), jnp.float32)
        for img in range(ni):
            xp_ref[img, :, 0:lpad] = zero_halo
            xp_ref[img, :, lpad + hw:lpad + hw + lpad] = zero_halo
            xp_ref[img, :, lpad:lpad + hw] = x_ref[img].astype(jnp.float32)

        # 2) Build the im2col operand (K*K*Cin, ni*H*W) from static lane-slices of the
        #    flat padded scratch. The flat zero halo covers the row boundary; the
        #    precomputed column masks cover the column boundary (one vmul per tap
        #    with dx != 0). Row ordering (kh, kw, c) matches the wrapper's weight
        #    reshape (Cout, kh, kw, c) -> (Cout, K*K*Cin).
        ims = []
        for img in range(ni):
            slabs = []
            for kh in range(k):
                for kw_ in range(k):
                    dy, dx = kh - pad, kw_ - pad
                    off = lpad + dy * w + dx
                    slab = xp_ref[img, :, off:off + hw]          # (Cin, H*W) static slice
                    if dx != 0:
                        slab = slab * m_ref[kw_]                 # zero the column halo
                    slabs.append(slab)
            ims.append(jnp.concatenate(slabs, axis=0))           # (K*K*Cin, H*W)
        im = ims[0] if ni == 1 else jnp.concatenate(ims, axis=1)  # (K*K*Cin, ni*H*W)

        # 3) Single MXU dot (one weight load, accumulation stays inside the MXU),
        #    then bias + ReLU on the VPU, lane-dense store.
        acc = jnp.dot(w_ref[...], im, preferred_element_type=jnp.float32)
        acc = acc + b_ref[...]                                   # (Cout,1) broadcast
        if use_act:
            acc = jnp.maximum(acc, 0.0)                          # ReLU; SE is Identity here

        for img in range(ni):
            o_ref[img] = acc[:, img * hw:(img + 1) * hw].astype(o_ref.dtype)

    return kernel


def mobileone_block_forward(x_nchw, w_oihw, bias):
    """NCHW in/out, folded OIHW weight + bias; conv+bias+ReLU fused in Pallas."""
    n, cin, h, w = x_nchw.shape
    cout = w_oihw.shape[0]
    assert STRIDE == 1 and GROUPS == 1
    hw = h * w
    padf = PAD * w + PAD                       # flat halo needed for row+col tap offsets
    lpad = ((padf + 127) // 128) * 128         # lane-aligned halo -> aligned interior store

    # Batch tiling: collapse the whole batch into one grid step on single-TC chips
    # (v5e/v6e: grid=(2,) only buys a second ~600-cycle step overhead); keep one image
    # per grid step on 2-TC chips (v7x) so both TensorCores get work.
    ncores = _num_tensorcores()
    if ncores > 1 and n % ncores == 0:
        ni = n // ncores
    else:
        ni = n
    grid_n = n // ni

    x_flat = x_nchw.reshape(n, cin, hw)                                      # free (contiguous)
    # Single lane-dense weight tile: (Cout, kh, kw, cin) -> (Cout, K*K*Cin) = (4, 36).
    w_mat = jnp.transpose(w_oihw, (0, 2, 3, 1)).reshape(cout, K * K * cin)
    b2 = bias.reshape(cout, 1)

    # Precompute the column-halo 0/1 masks host-side (trace time): row kw -> dx = kw-PAD.
    col = np.arange(hw, dtype=np.int64) % w
    masks_np = np.ones((K, 1, hw), np.float32)
    for kw_ in range(K):
        dx = kw_ - PAD
        if dx != 0:
            masks_np[kw_, 0, :] = ((col + dx >= 0) & (col + dx < w)).astype(np.float32)
    col_masks = jnp.asarray(masks_np)

    kernel = _make_conv_kernel(h, w, cin, cout, K, PAD, USE_ACT, ni, lpad)

    out_flat = pl.pallas_call(
        kernel,
        out_shape=jax.ShapeDtypeStruct((n, cout, hw), x_nchw.dtype),
        grid_spec=pltpu.PrefetchScalarGridSpec(
            num_scalar_prefetch=0,
            grid=(grid_n,),
            in_specs=[
                pl.BlockSpec((ni, cin, hw), lambda i: (i, 0, 0)),
                pl.BlockSpec((cout, K * K * cin), lambda i: (0, 0)),       # resident weights
                pl.BlockSpec((cout, 1), lambda i: (0, 0)),                 # resident bias
                pl.BlockSpec((K, 1, hw), lambda i: (0, 0, 0)),             # resident masks
            ],
            out_specs=pl.BlockSpec((ni, cout, hw), lambda i: (i, 0, 0)),
            scratch_shapes=[pltpu.VMEM((ni, cin, lpad + hw + lpad), jnp.float32)],
        ),
        compiler_params=pltpu.CompilerParams(
            dimension_semantics=("parallel",)),   # independent images -> both TCs on v7x
    )(x_flat, w_mat, b2, col_masks)

    return out_flat.reshape(n, cout, h, w)        # free reshape back to NCHW


# ---- Parameter construction & branch folding (plain-JAX glue) ---------------
def fuse_conv_bn(w, gamma, beta, rmean, rvar, eps=EPS):
    std = jnp.sqrt(rvar + eps)
    t = (gamma / std).reshape(-1, 1, 1, 1)
    return w * t, beta - rmean * gamma / std


def make_params(key):
    keys = iter(jax.random.split(key, 32))
    nk = lambda: next(keys)

    def bn_params(c):
        return dict(
            gamma=jax.random.uniform(nk(), (c,), minval=0.5, maxval=1.5),
            beta=jax.random.normal(nk(), (c,)) * 0.1,
            rmean=jax.random.normal(nk(), (c,)) * 0.1,
            rvar=jax.random.uniform(nk(), (c,), minval=0.5, maxval=1.5),
        )

    p = {}
    p["conv_w"] = [jax.random.normal(nk(), (OUT_C, IN_C // GROUPS, K, K)) * 0.1
                   for _ in range(NUM_CONV_BRANCHES)]
    p["conv_bn"] = [bn_params(OUT_C) for _ in range(NUM_CONV_BRANCHES)]
    p["scale_w"] = jax.random.normal(nk(), (OUT_C, IN_C // GROUPS, 1, 1)) * 0.1
    p["scale_bn"] = bn_params(OUT_C)
    p["skip_bn"] = bn_params(IN_C)   # active because out_channels == in_channels and stride == 1
    return p


def get_folded_kernel_bias(p):
    """Equivalent of MobileOneBlock._get_kernel_bias()."""
    # scale branch (1x1 conv + BN), padded to KxK
    k_scale, b_scale = fuse_conv_bn(p["scale_w"], **p["scale_bn"])
    pad = K // 2
    k_scale = jnp.pad(k_scale, ((0, 0), (0, 0), (pad, pad), (pad, pad)))

    # identity (skip) branch: BN only -> identity kernel fused with BN
    input_dim = IN_C // GROUPS
    id_k = np.zeros((IN_C, input_dim, K, K), dtype=np.float32)
    for i in range(IN_C):
        id_k[i, i % input_dim, K // 2, K // 2] = 1.0
    k_id, b_id = fuse_conv_bn(jnp.asarray(id_k), **p["skip_bn"])

    # KxK conv branches
    k_conv = jnp.zeros((OUT_C, IN_C // GROUPS, K, K), jnp.float32)
    b_conv = jnp.zeros((OUT_C,), jnp.float32)
    for i in range(NUM_CONV_BRANCHES):
        kk, bb = fuse_conv_bn(p["conv_w"][i], **p["conv_bn"][i])
        k_conv = k_conv + kk
        b_conv = b_conv + bb

    return k_conv + k_scale + k_id, b_conv + b_scale + b_id


# ---- Unfused multi-branch reference (mirrors MobileOneBlock.forward) --------
def torch_style_reference(x, p):
    def conv2d(x_, w_, stride, pad):
        return jax.lax.conv_general_dilated(
            x_, w_, (stride, stride), ((pad, pad), (pad, pad)),
            dimension_numbers=("NCHW", "OIHW", "NCHW"),
            feature_group_count=GROUPS)

    def bn(y, gamma, beta, rmean, rvar):
        sh = (1, -1, 1, 1)
        scale = (gamma / jnp.sqrt(rvar + EPS)).reshape(sh)
        return (y - rmean.reshape(sh)) * scale + beta.reshape(sh)

    identity_out = bn(x, **p["skip_bn"])
    scale_out = bn(conv2d(x, p["scale_w"], STRIDE, 0), **p["scale_bn"])
    out = scale_out + identity_out
    for i in range(NUM_CONV_BRANCHES):
        out = out + bn(conv2d(x, p["conv_w"][i], STRIDE, PAD), **p["conv_bn"][i])
    return jnp.maximum(out, 0.0)     # SE = Identity, activation = ReLU


if __name__ == "__main__":
    key = jax.random.PRNGKey(0)
    kp, kx = jax.random.split(key)

    params = make_params(kp)
    x = jax.random.normal(kx, (2, IN_C, 16, 16), dtype=jnp.float32)   # NCHW, like PyTorch

    w_folded, b_folded = get_folded_kernel_bias(params)
    fwd = jax.jit(mobileone_block_forward)
    out = jax.block_until_ready(fwd(x, w_folded, b_folded))

    ref = torch_style_reference(x, params)
    assert out.shape == ref.shape == (2, OUT_C, 16, 16)
    np.testing.assert_allclose(np.asarray(out), np.asarray(ref), rtol=1e-4, atol=1e-4)

    print("KERNEL_OK")
</pallas_src>

<mosaic_0001>
module attributes {stable_mosaic.version = 11 : i64} {
  func.func @kernel(%arg0: i32, %arg1: memref<2x4x256xf32, #tpu.memory_space<vmem>>, %arg2: memref<4x36xf32, #tpu.memory_space<vmem>>, %arg3: memref<4x1xf32, #tpu.memory_space<vmem>>, %arg4: memref<3x1x256xf32, #tpu.memory_space<vmem>>, %arg5: memref<2x4x256xf32, #tpu.memory_space<vmem>>, %arg6: memref<2x4x512xf32, #tpu.memory_space<vmem>>) attributes {dimension_semantics = [#tpu.dimension_semantics<parallel>], iteration_bounds = array<i64: 1>, scalar_prefetch = 0 : i64, scratch_operands = 1 : i64, tpu.core_type = #tpu.core_type<tc>, window_params = [{transform_indices = @transform_0, window_bounds = array<i64: 2, 4, 256>}, {pipeline_mode = #tpu.pipeline_mode<synchronous>, transform_indices = @transform_1, window_bounds = array<i64: 4, 36>}, {pipeline_mode = #tpu.pipeline_mode<synchronous>, transform_indices = @transform_2, window_bounds = array<i64: 4, 1>}, {pipeline_mode = #tpu.pipeline_mode<synchronous>, transform_indices = @transform_3, window_bounds = array<i64: 3, 1, 256>}, {transform_indices = @transform_4, window_bounds = array<i64: 2, 4, 256>}]} {
    %cst = arith.constant 0.000000e+00 : f32
    %0 = vector.broadcast %cst : f32 to vector<4x128xf32>
    %c0 = arith.constant 0 : index
    %c0_0 = arith.constant 0 : index
    %c0_1 = arith.constant 0 : index
    %1 = vector.load %arg6[%c0, %c0_0, %c0_1] : memref<2x4x512xf32, #tpu.memory_space<vmem>>, vector<1x4x128xf32>
    %2 = vector.shape_cast %1 : vector<1x4x128xf32> to vector<4x128xf32>
    %3 = vector.shape_cast %0 : vector<4x128xf32> to vector<1x4x128xf32>
    tpu.vector_store %arg6[%c0, %c0_0, %c0_1], %3 {strides = array<i32>} : memref<2x4x512xf32, #tpu.memory_space<vmem>>, vector<1x4x128xf32>,
    %c0_2 = arith.constant 0 : index
    %c0_3 = arith.constant 0 : index
    %c384 = arith.constant 384 : index
    %4 = vector.load %arg6[%c0_2, %c0_3, %c384] : memref<2x4x512xf32, #tpu.memory_space<vmem>>, vector<1x4x128xf32>
    %5 = vector.shape_cast %4 : vector<1x4x128xf32> to vector<4x128xf32>
    %6 = vector.shape_cast %0 : vector<4x128xf32> to vector<1x4x128xf32>
    tpu.vector_store %arg6[%c0_2, %c0_3, %c384], %6 {strides = array<i32>} : memref<2x4x512xf32, #tpu.memory_space<vmem>>, vector<1x4x128xf32>,
    %c0_4 = arith.constant 0 : index
    %c0_5 = arith.constant 0 : index
    %c0_6 = arith.constant 0 : index
    %7 = vector.load %arg1[%c0_4, %c0_5, %c0_6] : memref<2x4x256xf32, #tpu.memory_space<vmem>>, vector<1x4x256xf32>
    %8 = vector.shape_cast %7 : vector<1x4x256xf32> to vector<4x256xf32>
    %c0_7 = arith.constant 0 : index
    %c0_8 = arith.constant 0 : index
    %c128 = arith.constant 128 : index
    %9 = vector.load %arg6[%c0_7, %c0_8, %c128] : memref<2x4x512xf32, #tpu.memory_space<vmem>>, vector<1x4x256xf32>
    %10 = vector.shape_cast %9 : vector<1x4x256xf32> to vector<4x256xf32>
    %11 = vector.shape_cast %8 : vector<4x256xf32> to vector<1x4x256xf32>
    tpu.vector_store %arg6[%c0_7, %c0_8, %c128], %11 {strides = array<i32>} : memref<2x4x512xf32, #tpu.memory_space<vmem>>, vector<1x4x256xf32>,
    %c1 = arith.constant 1 : index
    %c0_9 = arith.constant 0 : index
    %c0_10 = arith.constant 0 : index
    %12 = vector.load %arg6[%c1, %c0_9, %c0_10] : memref<2x4x512xf32, #tpu.memory_space<vmem>>, vector<1x4x128xf32>
    %13 = vector.shape_cast %12 : vector<1x4x128xf32> to vector<4x128xf32>
    %14 = vector.shape_cast %0 : vector<4x128xf32> to vector<1x4x128xf32>
    tpu.vector_store %arg6[%c1, %c0_9, %c0_10], %14 {strides = array<i32>} : memref<2x4x512xf32, #tpu.memory_space<vmem>>, vector<1x4x128xf32>,
    %c1_11 = arith.constant 1 : index
    %c0_12 = arith.constant 0 : index
    %c384_13 = arith.constant 384 : index
    %15 = vector.load %arg6[%c1_11, %c0_12, %c384_13] : memref<2x4x512xf32, #tpu.memory_space<vmem>>, vector<1x4x128xf32>
    %16 = vector.shape_cast %15 : vector<1x4x128xf32> to vector<4x128xf32>
    %17 = vector.shape_cast %0 : vector<4x128xf32> to vector<1x4x128xf32>
    tpu.vector_store %arg6[%c1_11, %c0_12, %c384_13], %17 {strides = array<i32>} : memref<2x4x512xf32, #tpu.memory_space<vmem>>, vector<1x4x128xf32>,
    %c1_14 = arith.constant 1 : index
    %c0_15 = arith.constant 0 : index
    %c0_16 = arith.constant 0 : index
    %18 = vector.load %arg1[%c1_14, %c0_15, %c0_16] : memref<2x4x256xf32, #tpu.memory_space<vmem>>, vector<1x4x256xf32>
    %19 = vector.shape_cast %18 : vector<1x4x256xf32> to vector<4x256xf32>
    %c1_17 = arith.constant 1 : index
    %c0_18 = arith.constant 0 : index
    %c128_19 = arith.constant 128 : index
    %20 = vector.load %arg6[%c1_17, %c0_18, %c128_19] : memref<2x4x512xf32, #tpu.memory_space<vmem>>, vector<1x4x256xf32>
    %21 = vector.shape_cast %20 : vector<1x4x256xf32> to vector<4x256xf32>
    %22 = vector.shape_cast %19 : vector<4x256xf32> to vector<1x4x256xf32>
    tpu.vector_store %arg6[%c1_17, %c0_18, %c128_19], %22 {strides = array<i32>} : memref<2x4x512xf32, #tpu.memory_space<vmem>>, vector<1x4x256xf32>,
    %c0_20 = arith.constant 0 : index
    %c0_21 = arith.constant 0 : index
    %c111 = arith.constant 111 : index
    %23 = vector.load %arg6[%c0_20, %c0_21, %c111] : memref<2x4x512xf32, #tpu.memory_space<vmem>>, vector<1x4x256xf32>
    %24 = vector.shape_cast %23 : vector<1x4x256xf32> to vector<4x256xf32>
    %c0_22 = arith.constant 0 : index
    %c0_23 = arith.constant 0 : index
    %c0_24 = arith.constant 0 : index
    %25 = vector.load %arg4[%c0_22, %c0_23, %c0_24] : memref<3x1x256xf32, #tpu.memory_space<vmem>>, vector<1x1x256xf32>
    %26 = vector.shape_cast %25 : vector<1x1x256xf32> to vector<1x256xf32>
    %27 = vector.broadcast %26 : vector<1x256xf32> to vector<4x256xf32>
    %28 = arith.mulf %24, %27 : vector<4x256xf32>
    %c0_25 = arith.constant 0 : index
    %c0_26 = arith.constant 0 : index
    %c112 = arith.constant 112 : index
    %29 = vector.load %arg6[%c0_25, %c0_26, %c112] : memref<2x4x512xf32, #tpu.memory_space<vmem>>, vector<1x4x256xf32>
    %30 = vector.shape_cast %29 : vector<1x4x256xf32> to vector<4x256xf32>
    %c0_27 = arith.constant 0 : index
    %c0_28 = arith.constant 0 : index
    %c113 = arith.constant 113 : index
    %31 = vector.load %arg6[%c0_27, %c0_28, %c113] : memref<2x4x512xf32, #tpu.memory_space<vmem>>, vector<1x4x256xf32>
    %32 = vector.shape_cast %31 : vector<1x4x256xf32> to vector<4x256xf32>
    %c2 = arith.constant 2 : index
    %c0_29 = arith.constant 0 : index
    %c0_30 = arith.constant 0 : index
    %33 = vector.load %arg4[%c2, %c0_29, %c0_30] : memref<3x1x256xf32, #tpu.memory_space<vmem>>, vector<1x1x256xf32>
    %34 = vector.shape_cast %33 : vector<1x1x256xf32> to vector<1x256xf32>
    %35 = vector.broadcast %34 : vector<1x256xf32> to vector<4x256xf32>
    %36 = arith.mulf %32, %35 : vector<4x256xf32>
    %c0_31 = arith.constant 0 : index
    %c0_32 = arith.constant 0 : index
    %c127 = arith.constant 127 : index
    %37 = vector.load %arg6[%c0_31, %c0_32, %c127] : memref<2x4x512xf32, #tpu.memory_space<vmem>>, vector<1x4x256xf32>
    %38 = vector.shape_cast %37 : vector<1x4x256xf32> to vector<4x256xf32>
    %c0_33 = arith.constant 0 : index
    %c0_34 = arith.constant 0 : index
    %c0_35 = arith.constant 0 : index
    %39 = vector.load %arg4[%c0_33, %c0_34, %c0_35] : memref<3x1x256xf32, #tpu.memory_space<vmem>>, vector<1x1x256xf32>
    %40 = vector.shape_cast %39 : vector<1x1x256xf32> to vector<1x256xf32>
    %41 = vector.broadcast %40 : vector<1x256xf32> to vector<4x256xf32>
    %42 = arith.mulf %38, %41 : vector<4x256xf32>
    %c0_36 = arith.constant 0 : index
    %c0_37 = arith.constant 0 : index
    %c128_38 = arith.constant 128 : index
    %43 = vector.load %arg6[%c0_36, %c0_37, %c128_38] : memref<2x4x512xf32, #tpu.memory_space<vmem>>, vector<1x4x256xf32>
    %44 = vector.shape_cast %43 : vector<1x4x256xf32> to vector<4x256xf32>
    %c0_39 = arith.constant 0 : index
    %c0_40 = arith.constant 0 : index
    %c129 = arith.constant 129 : index
    %45 = vector.load %arg6[%c0_39, %c0_40, %c129] : memref<2x4x512xf32, #tpu.memory_space<vmem>>, vector<1x4x256xf32>
    %46 = vector.shape_cast %45 : vector<1x4x256xf32> to vector<4x256xf32>
    %c2_41 = arith.constant 2 : index
    %c0_42 = arith.constant 0 : index
    %c0_43 = arith.constant 0 : index
    %47 = vector.load %arg4[%c2_41, %c0_42, %c0_43] : memref<3x1x256xf32, #tpu.memory_space<vmem>>, vector<1x1x256xf32>
    %48 = vector.shape_cast %47 : vector<1x1x256xf32> to vector<1x256xf32>
    %49 = vector.broadcast %48 : vector<1x256xf32> to vector<4x256xf32>
    %50 = arith.mulf %46, %49 : vector<4x256xf32>
    %c0_44 = arith.constant 0 : index
    %c0_45 = arith.constant 0 : index
    %c143 = arith.constant 143 : index
    %51 = vector.load %arg6[%c0_44, %c0_45, %c143] : memref<2x4x512xf32, #tpu.memory_space<vmem>>, vector<1x4x256xf32>
    %52 = vector.shape_cast %51 : vector<1x4x256xf32> to vector<4x256xf32>
    %c0_46 = arith.constant 0 : index
    %c0_47 = arith.constant 0 : index
    %c0_48 = arith.constant 0 : index
    %53 = vector.load %arg4[%c0_46, %c0_47, %c0_48] : memref<3x1x256xf32, #tpu.memory_space<vmem>>, vector<1x1x256xf32>
    %54 = vector.shape_cast %53 : vector<1x1x256xf32> to vector<1x256xf32>
    %55 = vector.broadcast %54 : vector<1x256xf32> to vector<4x256xf32>
    %56 = arith.mulf %52, %55 : vector<4x256xf32>
    %c0_49 = arith.constant 0 : index
    %c0_50 = arith.constant 0 : index
    %c144 = arith.constant 144 : index
    %57 = vector.load %arg6[%c0_49, %c0_50, %c144] : memref<2x4x512xf32, #tpu.memory_space<vmem>>, vector<1x4x256xf32>
    %58 = vector.shape_cast %57 : vector<1x4x256xf32> to vector<4x256xf32>
    %c0_51 = arith.constant 0 : index
    %c0_52 = arith.constant 0 : index
    %c145 = arith.constant 145 : index
    %59 = vector.load %arg6[%c0_51, %c0_52, %c145] : memref<2x4x512xf32, #tpu.memory_space<vmem>>, vector<1x4x256xf32>
    %60 = vector.shape_cast %59 : vector<1x4x256xf32> to vector<4x256xf32>
    %c2_53 = arith.constant 2 : index
    %c0_54 = arith.constant 0 : index
    %c0_55 = arith.constant 0 : index
    %61 = vector.load %arg4[%c2_53, %c0_54, %c0_55] : memref<3x1x256xf32, #tpu.memory_space<vmem>>, vector<1x1x256xf32>
    %62 = vector.shape_cast %61 : vector<1x1x256xf32> to vector<1x256xf32>
    %63 = vector.broadcast %62 : vector<1x256xf32> to vector<4x256xf32>
    %64 = arith.mulf %60, %63 : vector<4x256xf32>
    %65 = tpu.concatenate %28, %30, %36, %42, %44, %50, %56, %58, %64 in 0 : vector<4x256xf32>, vector<4x256xf32>, vector<4x256xf32>, vector<4x256xf32>, vector<4x256xf32>, vector<4x256xf32>, vector<4x256xf32>, vector<4x256xf32>, vector<4x256xf32> -> vector<36x256xf32>
    %c1_56 = arith.constant 1 : index
    %c0_57 = arith.constant 0 : index
    %c111_58 = arith.constant 111 : index
    %66 = vector.load %arg6[%c1_56, %c0_57, %c111_58] : memref<2x4x512xf32, #tpu.memory_space<vmem>>, vector<1x4x256xf32>
    %67 = vector.shape_cast %66 : vector<1x4x256xf32> to vector<4x256xf32>
    %c0_59 = arith.constant 0 : index
    %c0_60 = arith.constant 0 : index
    %c0_61 = arith.constant 0 : index
    %68 = vector.load %arg4[%c0_59, %c0_60, %c0_61] : memref<3x1x256xf32, #tpu.memory_space<vmem>>, vector<1x1x256xf32>
    %69 = vector.shape_cast %68 : vector<1x1x256xf32> to vector<1x256xf32>
    %70 = vector.broadcast %69 : vector<1x256xf32> to vector<4x256xf32>
    %71 = arith.mulf %67, %70 : vector<4x256xf32>
    %c1_62 = arith.constant 1 : index
    %c0_63 = arith.constant 0 : index
    %c112_64 = arith.constant 112 : index
    %72 = vector.load %arg6[%c1_62, %c0_63, %c112_64] : memref<2x4x512xf32, #tpu.memory_space<vmem>>, vector<1x4x256xf32>
    %73 = vector.shape_cast %72 : vector<1x4x256xf32> to vector<4x256xf32>
    %c1_65 = arith.constant 1 : index
    %c0_66 = arith.constant 0 : index
    %c113_67 = arith.constant 113 : index
    %74 = vector.load %arg6[%c1_65, %c0_66, %c113_67] : memref<2x4x512xf32, #tpu.memory_space<vmem>>, vector<1x4x256xf32>
    %75 = vector.shape_cast %74 : vector<1x4x256xf32> to vector<4x256xf32>
    %c2_68 = arith.constant 2 : index
    %c0_69 = arith.constant 0 : index
    %c0_70 = arith.constant 0 : index
    %76 = vector.load %arg4[%c2_68, %c0_69, %c0_70] : memref<3x1x256xf32, #tpu.memory_space<vmem>>, vector<1x1x256xf32>
    %77 = vector.shape_cast %76 : vector<1x1x256xf32> to vector<1x256xf32>
    %78 = vector.broadcast %77 : vector<1x256xf32> to vector<4x256xf32>
    %79 = arith.mulf %75, %78 : vector<4x256xf32>
    %c1_71 = arith.constant 1 : index
    %c0_72 = arith.constant 0 : index
    %c127_73 = arith.constant 127 : index
    %80 = vector.load %arg6[%c1_71, %c0_72, %c127_73] : memref<2x4x512xf32, #tpu.memory_space<vmem>>, vector<1x4x256xf32>
    %81 = vector.shape_cast %80 : vector<1x4x256xf32> to vector<4x256xf32>
    %c0_74 = arith.constant 0 : index
    %c0_75 = arith.constant 0 : index
    %c0_76 = arith.constant 0 : index
    %82 = vector.load %arg4[%c0_74, %c0_75, %c0_76] : memref<3x1x256xf32, #tpu.memory_space<vmem>>, vector<1x1x256xf32>
    %83 = vector.shape_cast %82 : vector<1x1x256xf32> to vector<1x256xf32>
    %84 = vector.broadcast %83 : vector<1x256xf32> to vector<4x256xf32>
    %85 = arith.mulf %81, %84 : vector<4x256xf32>
    %c1_77 = arith.constant 1 : index
    %c0_78 = arith.constant 0 : index
    %c128_79 = arith.constant 128 : index
    %86 = vector.load %arg6[%c1_77, %c0_78, %c128_79] : memref<2x4x512xf32, #tpu.memory_space<vmem>>, vector<1x4x256xf32>
    %87 = vector.shape_cast %86 : vector<1x4x256xf32> to vector<4x256xf32>
    %c1_80 = arith.constant 1 : index
    %c0_81 = arith.constant 0 : index
    %c129_82 = arith.constant 129 : index
    %88 = vector.load %arg6[%c1_80, %c0_81, %c129_82] : memref<2x4x512xf32, #tpu.memory_space<vmem>>, vector<1x4x256xf32>
    %89 = vector.shape_cast %88 : vector<1x4x256xf32> to vector<4x256xf32>
    %c2_83 = arith.constant 2 : index
    %c0_84 = arith.constant 0 : index
    %c0_85 = arith.constant 0 : index
    %90 = vector.load %arg4[%c2_83, %c0_84, %c0_85] : memref<3x1x256xf32, #tpu.memory_space<vmem>>, vector<1x1x256xf32>
    %91 = vector.shape_cast %90 : vector<1x1x256xf32> to vector<1x256xf32>
    %92 = vector.broadcast %91 : vector<1x256xf32> to vector<4x256xf32>
    %93 = arith.mulf %89, %92 : vector<4x256xf32>
    %c1_86 = arith.constant 1 : index
    %c0_87 = arith.constant 0 : index
    %c143_88 = arith.constant 143 : index
    %94 = vector.load %arg6[%c1_86, %c0_87, %c143_88] : memref<2x4x512xf32, #tpu.memory_space<vmem>>, vector<1x4x256xf32>
    %95 = vector.shape_cast %94 : vector<1x4x256xf32> to vector<4x256xf32>
    %c0_89 = arith.constant 0 : index
    %c0_90 = arith.constant 0 : index
    %c0_91 = arith.constant 0 : index
    %96 = vector.load %arg4[%c0_89, %c0_90, %c0_91] : memref<3x1x256xf32, #tpu.memory_space<vmem>>, vector<1x1x256xf32>
    %97 = vector.shape_cast %96 : vector<1x1x256xf32> to vector<1x256xf32>
    %98 = vector.broadcast %97 : vector<1x256xf32> to vector<4x256xf32>
    %99 = arith.mulf %95, %98 : vector<4x256xf32>
    %c1_92 = arith.constant 1 : index
    %c0_93 = arith.constant 0 : index
    %c144_94 = arith.constant 144 : index
    %100 = vector.load %arg6[%c1_92, %c0_93, %c144_94] : memref<2x4x512xf32, #tpu.memory_space<vmem>>, vector<1x4x256xf32>
    %101 = vector.shape_cast %100 : vector<1x4x256xf32> to vector<4x256xf32>
    %c1_95 = arith.constant 1 : index
    %c0_96 = arith.constant 0 : index
    %c145_97 = arith.constant 145 : index
    %102 = vector.load %arg6[%c1_95, %c0_96, %c145_97] : memref<2x4x512xf32, #tpu.memory_space<vmem>>, vector<1x4x256xf32>
    %103 = vector.shape_cast %102 : vector<1x4x256xf32> to vector<4x256xf32>
    %c2_98 = arith.constant 2 : index
    %c0_99 = arith.constant 0 : index
    %c0_100 = arith.constant 0 : index
    %104 = vector.load %arg4[%c2_98, %c0_99, %c0_100] : memref<3x1x256xf32, #tpu.memory_space<vmem>>, vector<1x1x256xf32>
    %105 = vector.shape_cast %104 : vector<1x1x256xf32> to vector<1x256xf32>
    %106 = vector.broadcast %105 : vector<1x256xf32> to vector<4x256xf32>
    %107 = arith.mulf %103, %106 : vector<4x256xf32>
    %108 = tpu.concatenate %71, %73, %79, %85, %87, %93, %99, %101, %107 in 0 : vector<4x256xf32>, vector<4x256xf32>, vector<4x256xf32>, vector<4x256xf32>, vector<4x256xf32>, vector<4x256xf32>, vector<4x256xf32>, vector<4x256xf32>, vector<4x256xf32> -> vector<36x256xf32>
    %109 = tpu.concatenate %65, %108 in 1 : vector<36x256xf32>, vector<36x256xf32> -> vector<36x512xf32>
    %c0_101 = arith.constant 0 : index
    %c0_102 = arith.constant 0 : index
    %110 = vector.load %arg2[%c0_101, %c0_102] : memref<4x36xf32, #tpu.memory_space<vmem>>, vector<4x36xf32>
    %cst_103 = arith.constant dense<0.000000e+00> : vector<4x512xf32>
    %111 = tpu.matmul %110, %109, %cst_103 {dimension_numbers = #tpu.dot_dimension_numbers<[1], [0], [0], [1], [0, 0, 1, 1], [], []>} : vector<4x36xf32>, vector<36x512xf32>, vector<4x512xf32> -> vector<4x512xf32>
    %c0_104 = arith.constant 0 : index
    %c0_105 = arith.constant 0 : index
    %112 = vector.load %arg3[%c0_104, %c0_105] : memref<4x1xf32, #tpu.memory_space<vmem>>, vector<4x1xf32>
    %113 = vector.broadcast %112 : vector<4x1xf32> to vector<4x512xf32>
    %114 = arith.addf %111, %113 : vector<4x512xf32>
    %cst_106 = arith.constant 0.000000e+00 : f32
    %115 = vector.broadcast %cst_106 : f32 to vector<4x512xf32>
    %116 = arith.maximumf %114, %115 : vector<4x512xf32>
    %117 = vector.extract_strided_slice %116 {offsets = [0, 0], sizes = [4, 256], strides = [1, 1]} : vector<4x512xf32> to vector<4x256xf32>
    %c0_107 = arith.constant 0 : index
    %c0_108 = arith.constant 0 : index
    %c0_109 = arith.constant 0 : index
    %118 = vector.load %arg5[%c0_107, %c0_108, %c0_109] : memref<2x4x256xf32, #tpu.memory_space<vmem>>, vector<1x4x256xf32>
    %119 = vector.shape_cast %118 : vector<1x4x256xf32> to vector<4x256xf32>
    %120 = vector.shape_cast %117 : vector<4x256xf32> to vector<1x4x256xf32>
    tpu.vector_store %arg5[%c0_107, %c0_108, %c0_109], %120 {strides = array<i32>} : memref<2x4x256xf32, #tpu.memory_space<vmem>>, vector<1x4x256xf32>,
    %121 = vector.extract_strided_slice %116 {offsets = [0, 256], sizes = [4, 256], strides = [1, 1]} : vector<4x512xf32> to vector<4x256xf32>
    %c1_110 = arith.constant 1 : index
    %c0_111 = arith.constant 0 : index
    %c0_112 = arith.constant 0 : index
    %122 = vector.load %arg5[%c1_110, %c0_111, %c0_112] : memref<2x4x256xf32, #tpu.memory_space<vmem>>, vector<1x4x256xf32>
    %123 = vector.shape_cast %122 : vector<1x4x256xf32> to vector<4x256xf32>
    %124 = vector.shape_cast %121 : vector<4x256xf32> to vector<1x4x256xf32>
    tpu.vector_store %arg5[%c1_110, %c0_111, %c0_112], %124 {strides = array<i32>} : memref<2x4x256xf32, #tpu.memory_space<vmem>>, vector<1x4x256xf32>,
    return
  }
  func.func @transform_0(%arg0: i32) -> (i32, i32, i32) {
    %c0_i32 = arith.constant 0 : i32
    %c0_i32_0 = arith.constant 0 : i32
    %c0_i32_1 = arith.constant 0 : i32
    return %arg0, %c0_i32, %c0_i32_0 : i32, i32, i32
  }
  func.func @transform_1(%arg0: i32) -> (i32, i32) {
    %c0_i32 = arith.constant 0 : i32
    %c0_i32_0 = arith.constant 0 : i32
    %c0_i32_1 = arith.constant 0 : i32
    return %c0_i32, %c0_i32_0 : i32, i32
  }
  func.func @transform_2(%arg0: i32) -> (i32, i32) {
    %c0_i32 = arith.constant 0 : i32
    %c0_i32_0 = arith.constant 0 : i32
    %c0_i32_1 = arith.constant 0 : i32
    return %c0_i32, %c0_i32_0 : i32, i32
  }
  func.func @transform_3(%arg0: i32) -> (i32, i32, i32) {
    %c0_i32 = arith.constant 0 : i32
    %c0_i32_0 = arith.constant 0 : i32
    %c0_i32_1 = arith.constant 0 : i32
    %c0_i32_2 = arith.constant 0 : i32
    return %c0_i32, %c0_i32_0, %c0_i32_1 : i32, i32, i32
  }
  func.func @transform_4(%arg0: i32) -> (i32, i32, i32) {
    %c0_i32 = arith.constant 0 : i32
    %c0_i32_0 = arith.constant 0 : i32
    %c0_i32_1 = arith.constant 0 : i32
    return %arg0, %c0_i32, %c0_i32_0 : i32, i32, i32
  }
}

</mosaic_0001>

<llo_original>
// kernel: mobileone_block_forward.1
$region0: #{mobileone_block_forward.1}
  #allocation0 [shape = 'u32[]', space=smem, size = 0x4, offset = 0x4, fixed_abs, tag = 'smem constant byte address 0x4 - core index']
  #allocation1 [shape = 'u32[144,128]{1,0:T(1,128)}', space=vmem, size = 0x12000, scoped, tag = 'internal scratch']
  #allocation2 [shape = 'f32[2,4,512]{2,1,0:T(4,128)}', space=vmem, size = 0x4000, scoped, tag = 'scratch operand']
  %s0 = inlined_call_operand.vmem [shape: f32[2,4,256], index: 0, kind: input, shape index: {}]
  %s1 = inlined_call_operand.vmem [shape: f32[4,36], index: 1, kind: input, shape index: {}]
  %s2 = inlined_call_operand.vmem [shape: f32[4,1], index: 2, kind: input, shape index: {}]
  %s3 = inlined_call_operand.vmem [shape: f32[3,1,256], index: 3, kind: input, shape index: {}]
  %s4 = inlined_call_operand.vmem [shape: f32[2,4,256], index: 4, kind: output, shape index: {}]
  %s5 = sld [smem:[#allocation0]]
  $region26: #{mobileone_block_forward.1} parent=0
    _
  %s7 = ssub.s32 1, %s5
  %s8 = scalar_select 0, %s7, %s5
  // Predicated region
  $region2: #{mobileone_block_forward.1} parent=0 // pred_check
    _
  $region3: #{mobileone_block_forward.1} parent=0 // pred_check_branch
    %10 = sbr.rel (0) target = $region5
  $region4: #{mobileone_block_forward.1} parent=0 // pred_region
    _
  $region5: #{mobileone_block_forward.1} parent=0 // pred_fallthru
    _
  // Predicated region
  $region6: #{mobileone_block_forward.1} parent=0 // pred_check
    _
  $region7: #{mobileone_block_forward.1} parent=0 // pred_check_branch
    %12 = sbr.rel (0) target = $region9
  $region8: #{mobileone_block_forward.1} parent=0 // pred_region
    _
  $region9: #{mobileone_block_forward.1} parent=0 // pred_fallthru
    _
  // Predicated region
  $region10: #{mobileone_block_forward.1} parent=0 // pred_check
    _
  $region11: #{mobileone_block_forward.1} parent=0 // pred_check_branch
    %14 = sbr.rel (0) target = $region13
  $region12: #{mobileone_block_forward.1} parent=0 // pred_region
    _
  $region13: #{mobileone_block_forward.1} parent=0 // pred_fallthru
    _
  // Predicated region
  $region14: #{mobileone_block_forward.1} parent=0 // pred_check
    _
  $region15: #{mobileone_block_forward.1} parent=0 // pred_check_branch
    %16 = sbr.rel (0) target = $region17
  $region16: #{mobileone_block_forward.1} parent=0 // pred_region
    _
  $region17: #{mobileone_block_forward.1} parent=0 // pred_fallthru
    _
  %17 = vst [vmem:[#allocation2] sm:$0xf] 0.0
  %18 = vst [vmem:[#allocation2 + $0xc] sm:$0xf] 0.0
  %v19 = vld [vmem:[%s0] sm:$0xff]
  %20 = vst [vmem:[#allocation2 + $0x4] sm:$0xff] %v19
  %s21 = scalar_lea.vmem [#allocation2], 16
  %22 = vst [vmem:[%s21] sm:$0xf] 0.0
  %23 = vst [vmem:[%s21 + $0xc] sm:$0xf] 0.0
  %s24 = scalar_lea.vmem %s0, 8
  %v25 = vld [vmem:[%s24] sm:$0xff]
  %26 = vst [vmem:[%s21 + $0x4] sm:$0xff] %v25
  %v27 = vld [vmem:[#allocation2] sm:$0xff]
  %v28 = vld [vmem:[#allocation2 + $0x8] sm:$0xf]
  %v29 = vld [vmem:[%s3] sm:$0x3]
  %v31 = vlaneseq
  %v32 = vshrl.u32 %v31, 7
  %v33 = vsub.s32 0, %v32
  %v34 = vrot.slane %v29, %v33
  %v35 = vlaneseq
  %v36 = vshrl.u32 %v35, 7
  %v37 = vsub.s32 1, %v36
  %v38 = vrot.slane %v29, %v37
  %v39 = vcombine.low %v34, %v38
  %40 = vrot.lane.b32.xlu0 %v39, 111
  %v41 = vpop.permute.xlu0 %40
  %v42 = vrot.slane %v41, 4
  %vm43 = vcmask 908288
  %v44 = vsel %vm43, %v42, %v41
  %v47 = vmul.f32 %v27, %v44
  %v48 = vmul.f32 %v28, %v42
  %s49 = scalar_lea.vmem %s3, 4
  %v50 = vld [vmem:[%s49] sm:$0x3]
  %v52 = vlaneseq
  %v53 = vshrl.u32 %v52, 7
  %v54 = vsub.s32 0, %v53
  %v55 = vrot.slane %v50, %v54
  %v56 = vlaneseq
  %v57 = vshrl.u32 %v56, 7
  %v58 = vsub.s32 1, %v57
  %v59 = vrot.slane %v50, %v58
  %v60 = vcombine.low %v55, %v59
  %61 = vrot.lane.b32.xlu0 %v60, 113
  %v62 = vpop.permute.xlu0 %61
  %v63 = vrot.slane %v62, 4
  %vm64 = vcmask 924672
  %v65 = vsel %vm64, %v63, %v62
  %v68 = vmul.f32 %v27, %v65
  %v69 = vmul.f32 %v28, %v63
  %70 = vrot.lane.b32.xlu0 %v39, 127
  %v71 = vpop.permute.xlu0 %70
  %v72 = vrot.slane %v71, 4
  %vm73 = vcmask 1039360
  %v74 = vsel %vm73, %v72, %v71
  %v77 = vmul.f32 %v27, %v74
  %v78 = vmul.f32 %v28, %v72
  %v79 = vld [vmem:[#allocation2 + $0x4] sm:$0xff]
  %v80 = vld [vmem:[#allocation2 + $0xc] sm:$0xf]
  %81 = vrot.lane.b32.xlu0 %v60, 1
  %v82 = vpop.permute.xlu0 %81
  %v83 = vrot.slane %v82, 4
  %vm84 = vcmask 7168
  %v85 = vsel %vm84, %v83, %v82
  %v88 = vmul.f32 %v79, %v85
  %v89 = vmul.f32 %v80, %v83
  %90 = vrot.lane.b32.xlu0 %v39, 15
  %v91 = vpop.permute.xlu0 %90
  %v92 = vrot.slane %v91, 4
  %vm93 = vcmask 121856
  %v94 = vsel %vm93, %v92, %v91
  %v97 = vmul.f32 %v79, %v94
  %v98 = vmul.f32 %v80, %v92
  %99 = vrot.lane.b32.xlu0 %v60, 17
  %v100 = vpop.permute.xlu0 %99
  %v101 = vrot.slane %v100, 4
  %vm102 = vcmask 138240
  %v103 = vsel %vm102, %v101, %v100
  %v106 = vmul.f32 %v79, %v103
  %v107 = vmul.f32 %v80, %v101
  %v109 = vcombine.high %v47, %v47
  %v113 = vcombine.low %v27, %v27
  %v114 = vcombine.low %v28, %v28
  %115 = vrot.lane.b32.xlu0 %v113, 127
  %v116 = vpop.permute.xlu0 %115
  %117 = vrot.lane.b32.xlu0 %v27, 127
  %v118 = vpop.permute.xlu0 %117
  %119 = vrot.lane.b32.xlu0 %v114, 127
  %v120 = vpop.permute.xlu0 %119
  %v121 = vsel %vm73, %v116, %v118
  %v122 = vsel %vm73, %v118, %v120
  %v128 = vcombine.high %v68, %v68
  %129 = vrot.lane.b32.xlu0 %v68, 126
  %v130 = vpop.permute.xlu0 %129
  %131 = vrot.lane.b32.xlu0 %v128, 126
  %v132 = vpop.permute.xlu0 %131
  %133 = vrot.lane.b32.xlu0 %v69, 126
  %v134 = vpop.permute.xlu0 %133
  %vm135 = vcmask 1031168
  %v136 = vsel %vm135, %v130, %v132
  %v137 = vsel %vm135, %v132, %v134
  %v143 = vcombine.low %v77, %v77
  %v144 = vcombine.low %v78, %v78
  %145 = vrot.lane.b32.xlu0 %v143, 112
  %v146 = vpop.permute.xlu0 %145
  %147 = vrot.lane.b32.xlu0 %v77, 112
  %v148 = vpop.permute.xlu0 %147
  %149 = vrot.lane.b32.xlu0 %v144, 112
  %v150 = vpop.permute.xlu0 %149
  %vm151 = vcmask 916480
  %v152 = vsel %vm151, %v146, %v148
  %v153 = vsel %vm151, %v148, %v150
  %v158 = vcombine.high %v79, %v79
  %159 = vrot.lane.b32.xlu0 %v79, 111
  %v160 = vpop.permute.xlu0 %159
  %161 = vrot.lane.b32.xlu0 %v158, 111
  %v162 = vpop.permute.xlu0 %161
  %v163 = vsel %vm43, %v160, %v162
  %v169 = vcombine.low %v88, %v88
  %v170 = vcombine.low %v89, %v89
  %171 = vrot.lane.b32.xlu0 %v169, 110
  %v172 = vpop.permute.xlu0 %171
  %173 = vrot.lane.b32.xlu0 %v88, 110
  %v174 = vpop.permute.xlu0 %173
  %175 = vrot.lane.b32.xlu0 %v170, 110
  %v176 = vpop.permute.xlu0 %175
  %vm177 = vcmask 900096
  %v178 = vsel %vm177, %v172, %v174
  %v179 = vsel %vm177, %v174, %v176
  %v185 = vcombine.high %v97, %v97
  %186 = vrot.lane.b32.xlu0 %v97, 96
  %v187 = vpop.permute.xlu0 %186
  %188 = vrot.lane.b32.xlu0 %v185, 96
  %v189 = vpop.permute.xlu0 %188
  %190 = vrot.lane.b32.xlu0 %v98, 96
  %v191 = vpop.permute.xlu0 %190
  %vm192 = vcmask 785408
  %v193 = vsel %vm192, %v187, %v189
  %v194 = vsel %vm192, %v189, %v191
  %v199 = vcombine.low %v79, %v79
  %v200 = vcombine.low %v80, %v80
  %201 = vrot.lane.b32.xlu0 %v199, 95
  %v202 = vpop.permute.xlu0 %201
  %203 = vrot.lane.b32.xlu0 %v79, 95
  %v204 = vpop.permute.xlu0 %203
  %205 = vrot.lane.b32.xlu0 %v200, 95
  %v206 = vpop.permute.xlu0 %205
  %vm207 = vcmask 777216
  %v208 = vsel %vm207, %v202, %v204
  %v209 = vsel %vm207, %v204, %v206
  %v215 = vcombine.high %v106, %v106
  %216 = vrot.lane.b32.xlu0 %v106, 94
  %v217 = vpop.permute.xlu0 %216
  %218 = vrot.lane.b32.xlu0 %v215, 94
  %v219 = vpop.permute.xlu0 %218
  %220 = vrot.lane.b32.xlu0 %v107, 94
  %v221 = vpop.permute.xlu0 %220
  %vm222 = vcmask 769024
  %v223 = vsel %vm222, %v217, %v219
  %v224 = vsel %vm222, %v219, %v221
  %vm225 = vcmask 1043456
  %v226 = vsel %vm225, %v47, %v121
  %v227 = vsel %vm225, %v109, %v122
  %v228 = vsel %vm225, %v48, %v120
  %v229 = vsel %vm225, %v136, %v152
  %v230 = vsel %vm225, %v137, %v153
  %v231 = vsel %vm225, %v134, %v150
  %v232 = vsel %vm225, %v160, %v172
  %v233 = vsel %vm225, %v163, %v178
  %v234 = vsel %vm225, %v162, %v179
  %v235 = vsel %vm225, %v187, %v202
  %v236 = vsel %vm225, %v193, %v208
  %v237 = vsel %vm225, %v194, %v209
  %v238 = vld [vmem:[%s21] sm:$0xff]
  %v239 = vld [vmem:[%s21 + $0x8] sm:$0xf]
  %v240 = vmul.f32 %v238, %v44
  %v241 = vmul.f32 %v239, %v42
  %v242 = vmul.f32 %v238, %v65
  %v243 = vmul.f32 %v239, %v63
  %v244 = vmul.f32 %v238, %v74
  %v245 = vmul.f32 %v239, %v72
  %v246 = vld [vmem:[%s21 + $0x4] sm:$0xff]
  %v247 = vld [vmem:[%s21 + $0xc] sm:$0xf]
  %v248 = vmul.f32 %v246, %v85
  %v249 = vmul.f32 %v247, %v83
  %v250 = vmul.f32 %v246, %v94
  %v251 = vmul.f32 %v247, %v92
  %v252 = vmul.f32 %v246, %v103
  %v253 = vmul.f32 %v247, %v101
  %v255 = vcombine.high %v240, %v240
  %v259 = vcombine.low %v238, %v238
  %v260 = vcombine.low %v239, %v239
  %261 = vrot.lane.b32.xlu0 %v259, 127
  %v262 = vpop.permute.xlu0 %261
  %263 = vrot.lane.b32.xlu0 %v238, 127
  %v264 = vpop.permute.xlu0 %263
  %265 = vrot.lane.b32.xlu0 %v260, 127
  %v266 = vpop.permute.xlu0 %265
  %v267 = vsel %vm73, %v262, %v264
  %v268 = vsel %vm73, %v264, %v266
  %v274 = vcombine.high %v242, %v242
  %275 = vrot.lane.b32.xlu0 %v242, 126
  %v276 = vpop.permute.xlu0 %275
  %277 = vrot.lane.b32.xlu0 %v274, 126
  %v278 = vpop.permute.xlu0 %277
  %279 = vrot.lane.b32.xlu0 %v243, 126
  %v280 = vpop.permute.xlu0 %279
  %v281 = vsel %vm135, %v276, %v278
  %v282 = vsel %vm135, %v278, %v280
  %v288 = vcombine.low %v244, %v244
  %v289 = vcombine.low %v245, %v245
  %290 = vrot.lane.b32.xlu0 %v288, 112
  %v291 = vpop.permute.xlu0 %290
  %292 = vrot.lane.b32.xlu0 %v244, 112
  %v293 = vpop.permute.xlu0 %292
  %294 = vrot.lane.b32.xlu0 %v289, 112
  %v295 = vpop.permute.xlu0 %294
  %v296 = vsel %vm151, %v291, %v293
  %v297 = vsel %vm151, %v293, %v295
  %v302 = vcombine.high %v246, %v246
  %303 = vrot.lane.b32.xlu0 %v246, 111
  %v304 = vpop.permute.xlu0 %303
  %305 = vrot.lane.b32.xlu0 %v302, 111
  %v306 = vpop.permute.xlu0 %305
  %v307 = vsel %vm43, %v304, %v306
  %v313 = vcombine.low %v248, %v248
  %v314 = vcombine.low %v249, %v249
  %315 = vrot.lane.b32.xlu0 %v313, 110
  %v316 = vpop.permute.xlu0 %315
  %317 = vrot.lane.b32.xlu0 %v248, 110
  %v318 = vpop.permute.xlu0 %317
  %319 = vrot.lane.b32.xlu0 %v314, 110
  %v320 = vpop.permute.xlu0 %319
  %v321 = vsel %vm177, %v316, %v318
  %v322 = vsel %vm177, %v318, %v320
  %v328 = vcombine.high %v250, %v250
  %329 = vrot.lane.b32.xlu0 %v250, 96
  %v330 = vpop.permute.xlu0 %329
  %331 = vrot.lane.b32.xlu0 %v328, 96
  %v332 = vpop.permute.xlu0 %331
  %333 = vrot.lane.b32.xlu0 %v251, 96
  %v334 = vpop.permute.xlu0 %333
  %v335 = vsel %vm192, %v330, %v332
  %v336 = vsel %vm192, %v332, %v334
  %v341 = vcombine.low %v246, %v246
  %v342 = vcombine.low %v247, %v247
  %343 = vrot.lane.b32.xlu0 %v341, 95
  %v344 = vpop.permute.xlu0 %343
  %345 = vrot.lane.b32.xlu0 %v246, 95
  %v346 = vpop.permute.xlu0 %345
  %347 = vrot.lane.b32.xlu0 %v342, 95
  %v348 = vpop.permute.xlu0 %347
  %v349 = vsel %vm207, %v344, %v346
  %v350 = vsel %vm207, %v346, %v348
  %v356 = vcombine.high %v252, %v252
  %357 = vrot.lane.b32.xlu0 %v252, 94
  %v358 = vpop.permute.xlu0 %357
  %359 = vrot.lane.b32.xlu0 %v356, 94
  %v360 = vpop.permute.xlu0 %359
  %361 = vrot.lane.b32.xlu0 %v253, 94
  %v362 = vpop.permute.xlu0 %361
  %v363 = vsel %vm222, %v358, %v360
  %v364 = vsel %vm222, %v360, %v362
  %v365 = vsel %vm225, %v240, %v267
  %v366 = vsel %vm225, %v255, %v268
  %v367 = vsel %vm225, %v241, %v266
  %v368 = vsel %vm225, %v281, %v296
  %v369 = vsel %vm225, %v282, %v297
  %v370 = vsel %vm225, %v280, %v295
  %v371 = vsel %vm225, %v304, %v316
  %v372 = vsel %vm225, %v307, %v321
  %v373 = vsel %vm225, %v306, %v322
  %v374 = vsel %vm225, %v330, %v344
  %v375 = vsel %vm225, %v335, %v349
  %v376 = vsel %vm225, %v336, %v350
  %389 = vrot.lane.b32.xlu0 %v226, 17
  %v390 = vpop.permute.xlu0 %389
  %391 = vrot.lane.b32.xlu0 %v227, 17
  %v392 = vpop.permute.xlu0 %391
  %393 = vrot.lane.b32.xlu0 %v228, 17
  %v394 = vpop.permute.xlu0 %393
  %395 = vrot.lane.b32.xlu0 %v229, 17
  %v396 = vpop.permute.xlu0 %395
  %397 = vrot.lane.b32.xlu0 %v230, 17
  %v398 = vpop.permute.xlu0 %397
  %399 = vrot.lane.b32.xlu0 %v231, 17
  %v400 = vpop.permute.xlu0 %399
  %401 = vrot.lane.b32.xlu0 %v232, 17
  %v402 = vpop.permute.xlu0 %401
  %403 = vrot.lane.b32.xlu0 %v233, 17
  %v404 = vpop.permute.xlu0 %403
  %405 = vrot.lane.b32.xlu0 %v234, 17
  %v406 = vpop.permute.xlu0 %405
  %407 = vrot.lane.b32.xlu0 %v235, 17
  %v408 = vpop.permute.xlu0 %407
  %409 = vrot.lane.b32.xlu0 %v236, 17
  %v410 = vpop.permute.xlu0 %409
  %411 = vrot.lane.b32.xlu0 %v237, 17
  %v412 = vpop.permute.xlu0 %411
  %413 = vrot.lane.b32.xlu0 %v217, 17
  %v414 = vpop.permute.xlu0 %413
  %415 = vrot.lane.b32.xlu0 %v223, 17
  %v416 = vpop.permute.xlu0 %415
  %417 = vrot.lane.b32.xlu0 %v224, 17
  %v418 = vpop.permute.xlu0 %417
  %v419 = vsel %vm102, %v390, %v392
  %v420 = vsel %vm102, %v392, %v394
  %v421 = vsel %vm102, %v396, %v398
  %v422 = vsel %vm102, %v398, %v400
  %v423 = vsel %vm102, %v402, %v404
  %v424 = vsel %vm102, %v404, %v406
  %v425 = vsel %vm102, %v408, %v410
  %v426 = vsel %vm102, %v410, %v412
  %v427 = vsel %vm102, %v414, %v416
  %v428 = vsel %vm102, %v416, %v418
  %449 = vrot.lane.b32.xlu0 %v365, 17
  %v450 = vpop.permute.xlu0 %449
  %451 = vrot.lane.b32.xlu0 %v366, 17
  %v452 = vpop.permute.xlu0 %451
  %453 = vrot.lane.b32.xlu0 %v367, 17
  %v454 = vpop.permute.xlu0 %453
  %455 = vrot.lane.b32.xlu0 %v368, 17
  %v456 = vpop.permute.xlu0 %455
  %457 = vrot.lane.b32.xlu0 %v369, 17
  %v458 = vpop.permute.xlu0 %457
  %459 = vrot.lane.b32.xlu0 %v370, 17
  %v460 = vpop.permute.xlu0 %459
  %461 = vrot.lane.b32.xlu0 %v371, 17
  %v462 = vpop.permute.xlu0 %461
  %463 = vrot.lane.b32.xlu0 %v372, 17
  %v464 = vpop.permute.xlu0 %463
  %465 = vrot.lane.b32.xlu0 %v373, 17
  %v466 = vpop.permute.xlu0 %465
  %467 = vrot.lane.b32.xlu0 %v374, 17
  %v468 = vpop.permute.xlu0 %467
  %469 = vrot.lane.b32.xlu0 %v375, 17
  %v470 = vpop.permute.xlu0 %469
  %471 = vrot.lane.b32.xlu0 %v376, 17
  %v472 = vpop.permute.xlu0 %471
  %473 = vrot.lane.b32.xlu0 %v358, 17
  %v474 = vpop.permute.xlu0 %473
  %475 = vrot.lane.b32.xlu0 %v363, 17
  %v476 = vpop.permute.xlu0 %475
  %477 = vrot.lane.b32.xlu0 %v364, 17
  %v478 = vpop.permute.xlu0 %477
  %v479 = vsel %vm102, %v450, %v452
  %v480 = vsel %vm102, %v452, %v454
  %v481 = vsel %vm102, %v456, %v458
  %v482 = vsel %vm102, %v458, %v460
  %v483 = vsel %vm102, %v462, %v464
  %v484 = vsel %vm102, %v464, %v466
  %v485 = vsel %vm102, %v468, %v470
  %v486 = vsel %vm102, %v470, %v472
  %v487 = vsel %vm102, %v474, %v476
  %v488 = vsel %vm102, %v476, %v478
  %v497 = vld [vmem:[%s1] sm:$0xf]
  %v498 = vld [vmem:[%s2] sm:$0xf]
  %500 = vset.pattern.permute.xlu0 0
  %501 = vperm.xlu0 %500, %v498
  %v502 = vpop.permute.xlu0 %501
  %vm504 = vcmask 293888
  %v506 = vsel %vm504, %v497, 0
  %v508 = vsel %vm225, %v427, 0
  %v510 = vsel %vm225, %v428, 0
  %v512 = vsel %vm225, %v487, 0
  %v514 = vsel %vm225, %v488, 0
  %516 = vmatprep.subr.mxu0 %v420
  %517 = vmatpush1.msra.mxu0 %v419
  %518 = vmatprep.subr.mxu0 %v422
  %519 = vmatpush1.msra.mxu0 %v421
  %520 = vmatprep.subr.mxu0 %v424
  %521 = vmatpush1.msra.mxu0 %v423
  %522 = vmatprep.subr.mxu0 %v426
  %523 = vmatpush1.msra.mxu0 %v425
  %524 = vmatprep.subr.mxu0 %v510
  %525 = vmatpush1.msra.mxu0 %v508
  %526 = vmatprep.subr.mxu0 0.0
  %527 = vmatpush1.msra.mxu0 0.0
  %528 = vmatprep.subr.mxu0 0.0
  %529 = vmatpush1.msra.mxu0 0.0
  %530 = vmatprep.subr.mxu0 0.0
  %531 = vmatpush1.msra.mxu0 0.0
  %532 = vmatprep.subr.mxu0 0.0
  %533 = vmatpush1.msra.mxu0 0.0
  %534 = vmatprep.subr.mxu0 0.0
  %535 = vmatpush1.msra.mxu0 0.0
  %536 = vmatprep.subr.mxu0 0.0
  %537 = vmatpush1.msra.mxu0 0.0
  %538 = vmatprep.subr.mxu0 0.0
  %539 = vmatpush1.msra.mxu0 0.0
  %540 = vmatprep.subr.mxu0 0.0
  %541 = vmatpush1.msra.mxu0 0.0
  %542 = vmatprep.subr.mxu0 0.0
  %543 = vmatpush1.msra.mxu0 0.0
  %544 = vmatprep.subr.mxu0 0.0
  %545 = vmatpush1.msra.mxu0 0.0
  %546 = vmatprep.subr.mxu0 0.0
  %547 = vmatpush1.msra.mxu0 0.0
  %548 = vmatprep.subr.mxu0 0.0
  %549 = vmatpush1.msra.mxu0 0.0
  %550 = vmatprep.subr.mxu0 0.0
  %551 = vmatpush1.msra.mxu0 0.0
  %552 = vmatprep.subr.mxu0 0.0
  %553 = vmatpush1.msra.mxu0 0.0
  %554 = vmatprep.subr.mxu0 0.0
  %555 = vmatpush1.msra.mxu0 0.0
  %556 = vmatprep.subr.mxu0 0.0
  %557 = vmatpush1.msra.mxu0 0.0
  %558 = vmatprep.subr.mxu0 0.0
  %559 = vmatpush1.msra.mxu0 0.0
  %560 = vmatprep.subr.mxu0 0.0
  %561 = vmatpush1.msra.mxu0 0.0
  %562 = vmatprep.subr.mxu0 0.0
  %563 = vmatpush1.msra.mxu0 0.0
  %564 = vmatprep.subr.mxu0 0.0
  %565 = vmatpush1.msra.mxu0 0.0
  %566 = vmatprep.subr.mxu0 0.0
  %567 = vmatpush1.msra.mxu0 0.0
  %568 = vmatprep.subr.mxu0 0.0
  %569 = vmatpush1.msra.mxu0 0.0
  %570 = vmatprep.subr.mxu0 0.0
  %571 = vmatpush1.msra.mxu0 0.0
  %572 = vmatprep.subr.mxu0 0.0
  %573 = vmatpush1.msra.mxu0 0.0
  %574 = vmatprep.subr.mxu0 0.0
  %575 = vmatpush1.msra.mxu0 0.0
  %576 = vmatprep.subr.mxu0 0.0
  %577 = vmatpush1.msra.mxu0 0.0
  %578 = vmatprep.subr.mxu0 0.0
  %579 = vmatpush1.msra.mxu0 0.0
  %580 = vmatprep.mubr.f32.mxu0 0.0
  %581 = vmatmul.mubr.f32.gmra.mrb[0].mxu0 %v506
  %v582 = vpop.f32.mrb[0].mxu0
  %v583 = vadd.f32 %v502, %v582
  %v584 = vpop.f32.mrb[0].mxu0
  %v585 = vadd.f32 %v502, %v584
  %586 = vdwg.mxu0
  %587 = vmatprep.subr.mxu0 %v480
  %588 = vmatpush1.msra.mxu0 %v479
  %589 = vmatprep.subr.mxu0 %v482
  %590 = vmatpush1.msra.mxu0 %v481
  %591 = vmatprep.subr.mxu0 %v484
  %592 = vmatpush1.msra.mxu0 %v483
  %593 = vmatprep.subr.mxu0 %v486
  %594 = vmatpush1.msra.mxu0 %v485
  %595 = vmatprep.subr.mxu0 %v514
  %596 = vmatpush1.msra.mxu0 %v512
  %597 = vmatprep.subr.mxu0 0.0
  %598 = vmatpush1.msra.mxu0 0.0
  %599 = vmatprep.subr.mxu0 0.0
  %600 = vmatpush1.msra.mxu0 0.0
  %601 = vmatprep.subr.mxu0 0.0
  %602 = vmatpush1.msra.mxu0 0.0
  %603 = vmatprep.subr.mxu0 0.0
  %604 = vmatpush1.msra.mxu0 0.0
  %605 = vmatprep.subr.mxu0 0.0
  %606 = vmatpush1.msra.mxu0 0.0
  %607 = vmatprep.subr.mxu0 0.0
  %608 = vmatpush1.msra.mxu0 0.0
  %609 = vmatprep.subr.mxu0 0.0
  %610 = vmatpush1.msra.mxu0 0.0
  %611 = vmatprep.subr.mxu0 0.0
  %612 = vmatpush1.msra.mxu0 0.0
  %613 = vmatprep.subr.mxu0 0.0
  %614 = vmatpush1.msra.mxu0 0.0
  %615 = vmatprep.subr.mxu0 0.0
  %616 = vmatpush1.msra.mxu0 0.0
  %617 = vmatprep.subr.mxu0 0.0
  %618 = vmatpush1.msra.mxu0 0.0
  %619 = vmatprep.subr.mxu0 0.0
  %620 = vmatpush1.msra.mxu0 0.0
  %621 = vmatprep.subr.mxu0 0.0
  %622 = vmatpush1.msra.mxu0 0.0
  %623 = vmatprep.subr.mxu0 0.0
  %624 = vmatpush1.msra.mxu0 0.0
  %625 = vmatprep.subr.mxu0 0.0
  %626 = vmatpush1.msra.mxu0 0.0
  %627 = vmatprep.subr.mxu0 0.0
  %628 = vmatpush1.msra.mxu0 0.0
  %629 = vmatprep.subr.mxu0 0.0
  %630 = vmatpush1.msra.mxu0 0.0
  %631 = vmatprep.subr.mxu0 0.0
  %632 = vmatpush1.msra.mxu0 0.0
  %633 = vmatprep.subr.mxu0 0.0
  %634 = vmatpush1.msra.mxu0 0.0
  %635 = vmatprep.subr.mxu0 0.0
  %636 = vmatpush1.msra.mxu0 0.0
  %637 = vmatprep.subr.mxu0 0.0
  %638 = vmatpush1.msra.mxu0 0.0
  %639 = vmatprep.subr.mxu0 0.0
  %640 = vmatpush1.msra.mxu0 0.0
  %641 = vmatprep.subr.mxu0 0.0
  %642 = vmatpush1.msra.mxu0 0.0
  %643 = vmatprep.subr.mxu0 0.0
  %644 = vmatpush1.msra.mxu0 0.0
  %645 = vmatprep.subr.mxu0 0.0
  %646 = vmatpush1.msra.mxu0 0.0
  %647 = vmatprep.subr.mxu0 0.0
  %648 = vmatpush1.msra.mxu0 0.0
  %649 = vmatprep.subr.mxu0 0.0
  %650 = vmatpush1.msra.mxu0 0.0
  %651 = vmatprep.mubr.f32.mxu0 0.0
  %652 = vmatmul.mubr.f32.gmra.mrb[0].mxu0 %v506
  %v653 = vpop.f32.mrb[0].mxu0
  %v654 = vadd.f32 %v502, %v653
  %v655 = vpop.f32.mrb[0].mxu0
  %v656 = vadd.f32 %v502, %v655
  %657 = vdwg.mxu0
  %v658 = vmax.f32 %v583, 0.0
  %v659 = vmax.f32 %v585, 0.0
  %v660 = vmax.f32 %v654, 0.0
  %v661 = vmax.f32 %v656, 0.0
  %v664 = vcombine.low %v658, %v659
  %666 = vst [vmem:[%s4] sm:$0xff] %v664
  %v669 = vcombine.low %v660, %v661
  %s671 = scalar_lea.vmem %s4, 8
  %672 = vst [vmem:[%s671] sm:$0xff] %v669
  // Predicated region
  $region18: #{mobileone_block_forward.1} parent=0 // pred_check
    _
  $region19: #{mobileone_block_forward.1} parent=0 // pred_check_branch
    %674 = sbr.rel (0) target = $region21
  $region20: #{mobileone_block_forward.1} parent=0 // pred_region
    _
  $region21: #{mobileone_block_forward.1} parent=0 // pred_fallthru
    _
  // Predicated region
  $region22: #{mobileone_block_forward.1} parent=0 // pred_check
    _
  $region23: #{mobileone_block_forward.1} parent=0 // pred_check_branch
    %676 = sbr.rel (0) target = $region25
  $region24: #{mobileone_block_forward.1} parent=0 // pred_region
    _
  $region25: #{mobileone_block_forward.1} parent=0 // pred_fallthru
    _

</llo_original>
